<compile_context>
chip_gen: v5e
topology: v5e:2x2
jax: 0.10.0
libtpu: 0.0.40
codegen_flags: <defaults>
</compile_context>

<pallas_src>
import functools

import jax
import jax.numpy as jnp
from jax.experimental import pallas as pl
from jax.experimental.pallas import tpu as pltpu

_LANE = 128     # lane width: last dim of every block is a multiple of this
_SUBLANE = 8    # sublane width: token-tile size is a multiple of this


def _round_up(n, m):
    return ((n + m - 1) // m) * m


def _vmem_budget_bytes():
    """~75% of physical per-core VMEM (leaves headroom for Mosaic scratch)."""
    try:
        cap = int(pltpu.get_tpu_info().vmem_capacity_bytes)
    except Exception:
        cap = 64 << 20  # conservative fallback (v7x-sized)
    return (cap * 3) // 4


def prepare_residual_mlp_params(w1, b1, w2, b2):
    """Pad to lane-dense shapes and cast once at init (hoisted off the call path).

    w1: [D, H], b1: [H] or [1, H], w2: [H, D], b2: [D] or [1, D]  (W pre-transposed
    vs. PyTorch nn.Linear so the kernel does plain row-major matmuls).
    Zero padding contributes exactly 0 through matmuls, biases, GELU(0)=0 and the
    residual, so padded columns are simply sliced off after the kernel.
    """
    D, H = w1.shape
    Dp, Hp = _round_up(D, _LANE), _round_up(H, _LANE)
    b1 = jnp.reshape(b1, (1, -1))
    b2 = jnp.reshape(b2, (1, -1))
    w1p = jnp.zeros((Dp, Hp), jnp.bfloat16).at[:D, :H].set(w1.astype(jnp.bfloat16))
    b1p = jnp.zeros((1, Hp), jnp.float32).at[:, :H].set(b1.astype(jnp.float32))
    w2p = jnp.zeros((Hp, Dp), jnp.bfloat16).at[:H, :D].set(w2.astype(jnp.bfloat16))
    b2p = jnp.zeros((1, Dp), jnp.float32).at[:, :D].set(b2.astype(jnp.float32))
    return w1p, b1p, w2p, b2p


def _residual_mlp_kernel(x_ref, w1_ref, b1_ref, w2_ref, b2_ref, o_ref, *, gelu_in_bf16):
    x = x_ref[...]                                            # (TN, Dp), residual dtype
    acc1 = jnp.dot(x.astype(jnp.bfloat16), w1_ref[...],      # MXU, f32 accumulate
                   preferred_element_type=jnp.float32)
    if gelu_in_bf16:
        # bf16 bias-add output + bf16 GELU (v6e/v7x bf16 VPU/EUP); operand was
        # going to bf16 for the second matmul anyway.
        h = jax.nn.gelu((acc1 + b1_ref[...]).astype(jnp.bfloat16))
    else:
        # f32 elementwise path (v5e has no bf16 VPU/EUP).
        h = jax.nn.gelu(acc1 + b1_ref[...]).astype(jnp.bfloat16)
    y = jnp.dot(h, w2_ref[...], preferred_element_type=jnp.float32) + b2_ref[...]
    # ResidualAdd: x = fn(x) + x
    o_ref[...] = (y + x.astype(jnp.float32)).astype(o_ref.dtype)


def _derive_token_tile(n_tokens, dp, hp, block_tokens, x_itemsize, vmem_budget):
    # Rough VMEM model (bytes): single-buffered bf16 weights + f32 biases,
    # double-buffered x-in / out tiles, f32 (TN, Hp) hidden intermediate.
    weight_bytes = 2 * dp * hp * 2 + (hp + dp) * 4
    per_token = 4 * dp * x_itemsize + 2 * hp * 4
    avail = max(vmem_budget - weight_bytes, per_token * _SUBLANE)
    tn = min(_round_up(block_tokens, _SUBLANE),
             max(_SUBLANE, (avail // per_token) // _SUBLANE * _SUBLANE))
    # >=2 grid steps whenever possible so both v7x TensorCores get work.
    tn = min(tn, _round_up(pl.cdiv(n_tokens, 2), _SUBLANE))
    tn = min(tn, _round_up(n_tokens, _SUBLANE))
    return max(_SUBLANE, tn)


def residual_add_mlp(x, padded_params, *, block_tokens=512, gelu_in_bf16=True):
    """x: [N, D] tokens-major; padded_params from prepare_residual_mlp_params."""
    w1p, b1p, w2p, b2p = padded_params
    N, D = x.shape
    Dp, Hp = w1p.shape

    budget = _vmem_budget_bytes()
    TN = _derive_token_tile(N, Dp, Hp, block_tokens, x.dtype.itemsize, budget)
    grid = (pl.cdiv(N, TN),)

    # Feature axis only needs a host-side pad when D is not lane-aligned; the
    # token axis is handled by Pallas' masked writeback of the partial tile.
    if Dp != D:
        x_in = jnp.zeros((N, Dp), x.dtype).at[:, :D].set(x)
    else:
        x_in = x

    kernel = functools.partial(_residual_mlp_kernel, gelu_in_bf16=gelu_in_bf16)

    def _call(single_buffer_weights, vmem_limit):
        wkw = {"pipeline_mode": pl.Buffered(1)} if single_buffer_weights else {}
        return pl.pallas_call(
            kernel,
            out_shape=jax.ShapeDtypeStruct((N, Dp), x.dtype),
            grid_spec=pltpu.PrefetchScalarGridSpec(
                num_scalar_prefetch=0,
                grid=grid,
                in_specs=[
                    pl.BlockSpec((TN, Dp), lambda i: (i, 0)),          # x tile (pipelined)
                    pl.BlockSpec((Dp, Hp), lambda i: (0, 0), **wkw),   # W1 resident
                    pl.BlockSpec((1, Hp), lambda i: (0, 0), **wkw),    # b1 resident
                    pl.BlockSpec((Hp, Dp), lambda i: (0, 0), **wkw),   # W2 resident
                    pl.BlockSpec((1, Dp), lambda i: (0, 0), **wkw),    # b2 resident
                ],
                out_specs=pl.BlockSpec((TN, Dp), lambda i: (i, 0)),
            ),
            compiler_params=pltpu.CompilerParams(
                dimension_semantics=("parallel",),   # shard token tiles across TCs
                vmem_limit_bytes=vmem_limit,
            ),
        )(x_in, w1p, b1p, w2p, b2p)

    try:
        out = _call(single_buffer_weights=True, vmem_limit=budget)
    except Exception:
        # Fallback: default double-buffered operands, conservative VMEM limit.
        out = _call(single_buffer_weights=False, vmem_limit=min(budget, 48 << 20))

    return out[:, :D] if Dp != D else out


def residual_add_mlp_ref(x, w1, b1, w2, b2, *, gelu_in_bf16=True):
    """Pure-JAX reference mirroring the kernel numerics (bf16 MXU inputs, f32 accum)."""
    xf = x.astype(jnp.float32)
    h = jnp.dot(x.astype(jnp.bfloat16), w1.astype(jnp.bfloat16),
                preferred_element_type=jnp.float32) + jnp.reshape(b1, (1, -1)).astype(jnp.float32)
    if gelu_in_bf16:
        h = jax.nn.gelu(h.astype(jnp.bfloat16))
    else:
        h = jax.nn.gelu(h).astype(jnp.bfloat16)
    y = jnp.dot(h, w2.astype(jnp.bfloat16),
                preferred_element_type=jnp.float32) + jnp.reshape(b2, (1, -1)).astype(jnp.float32)
    return (y + xf).astype(x.dtype)


if __name__ == "__main__":
    key = jax.random.PRNGKey(0)
    k_x, k_w1, k_b1, k_w2, k_b2 = jax.random.split(key, 5)

    # Small shapes: batch=2, seq=8 -> N = 16 tokens, feature D = 32, MLP hidden H = 64.
    B, S, D, H = 2, 8, 32, 64
    N = B * S

    x = jax.random.normal(k_x, (B, S, D), dtype=jnp.float32)
    # Deterministic synthetic parameters (nn.Linear-style scale).
    w1 = jax.random.normal(k_w1, (D, H), dtype=jnp.float32) * (1.0 / (D ** 0.5))
    b1 = jax.random.normal(k_b1, (H,), dtype=jnp.float32) * 0.01
    w2 = jax.random.normal(k_w2, (H, D), dtype=jnp.float32) * (1.0 / (H ** 0.5))
    b2 = jax.random.normal(k_b2, (D,), dtype=jnp.float32) * 0.01

    # Pad/cast weights once (hoisted off the per-call path).
    params = prepare_residual_mlp_params(w1, b1, w2, b2)

    x2d = x.reshape(N, D)                       # glue reshape outside the kernel
    # Derived TN is capped at ceil(N/2)=8 here, so even this tiny N exercises a
    # 2-step pipelined grid; production shapes use larger TN sized to the VMEM budget.
    out = residual_add_mlp(x2d, params, block_tokens=512, gelu_in_bf16=True)
    out = jax.block_until_ready(out).reshape(B, S, D)

    ref = residual_add_mlp_ref(x2d, w1, b1, w2, b2, gelu_in_bf16=True).reshape(B, S, D)
    # bf16 MXU inputs + bf16 GELU => bf16-level agreement (differs from a pure-f32
    # PyTorch Linear by ~1e-2 relative; acceptable for training).
    assert jnp.allclose(out, ref, atol=2e-2, rtol=2e-2), "mismatch vs reference"

    print("KERNEL_OK")
</pallas_src>

<mosaic_0001>
module attributes {stable_mosaic.version = 11 : i64} {
  func.func @_residual_mlp_kernel(%arg0: i32, %arg1: memref<8x128xf32, #tpu.memory_space<vmem>>, %arg2: memref<128x128xbf16, #tpu.memory_space<vmem>>, %arg3: memref<1x128xf32, #tpu.memory_space<vmem>>, %arg4: memref<128x128xbf16, #tpu.memory_space<vmem>>, %arg5: memref<1x128xf32, #tpu.memory_space<vmem>>, %arg6: memref<8x128xf32, #tpu.memory_space<vmem>>) attributes {dimension_semantics = [#tpu.dimension_semantics<parallel>], iteration_bounds = array<i64: 2>, scalar_prefetch = 0 : i64, scratch_operands = 0 : i64, tpu.core_type = #tpu.core_type<tc>, window_params = [{transform_indices = @transform_0, window_bounds = array<i64: 8, 128>}, {pipeline_mode = #tpu.pipeline_mode<synchronous>, transform_indices = @transform_1, window_bounds = array<i64: 128, 128>}, {pipeline_mode = #tpu.pipeline_mode<synchronous>, transform_indices = @transform_2, window_bounds = array<i64: 1, 128>}, {pipeline_mode = #tpu.pipeline_mode<synchronous>, transform_indices = @transform_3, window_bounds = array<i64: 128, 128>}, {pipeline_mode = #tpu.pipeline_mode<synchronous>, transform_indices = @transform_4, window_bounds = array<i64: 1, 128>}, {transform_indices = @transform_5, window_bounds = array<i64: 8, 128>}]} {
    %c0 = arith.constant 0 : index
    %c0_0 = arith.constant 0 : index
    %0 = vector.load %arg1[%c0, %c0_0] : memref<8x128xf32, #tpu.memory_space<vmem>>, vector<8x128xf32>
    %1 = arith.truncf %0 : vector<8x128xf32> to vector<8x128xbf16>
    %c0_1 = arith.constant 0 : index
    %c0_2 = arith.constant 0 : index
    %2 = vector.load %arg2[%c0_1, %c0_2] : memref<128x128xbf16, #tpu.memory_space<vmem>>, vector<128x128xbf16>
    %cst = arith.constant dense<0.000000e+00> : vector<8x128xf32>
    %3 = tpu.matmul %1, %2, %cst {dimension_numbers = #tpu.dot_dimension_numbers<[1], [0], [0], [1], [0, 0, 1, 1], [], []>} : vector<8x128xbf16>, vector<128x128xbf16>, vector<8x128xf32> -> vector<8x128xf32>
    %c0_3 = arith.constant 0 : index
    %c0_4 = arith.constant 0 : index
    %4 = vector.load %arg3[%c0_3, %c0_4] : memref<1x128xf32, #tpu.memory_space<vmem>>, vector<1x128xf32>
    %5 = vector.broadcast %4 : vector<1x128xf32> to vector<8x128xf32>
    %6 = arith.addf %3, %5 : vector<8x128xf32>
    %7 = arith.truncf %6 : vector<8x128xf32> to vector<8x128xbf16>
    %8 = arith.mulf %7, %7 : vector<8x128xbf16>
    %9 = arith.mulf %7, %8 : vector<8x128xbf16>
    %cst_5 = arith.constant 4.467770e-02 : bf16
    %10 = vector.broadcast %cst_5 : bf16 to vector<8x128xbf16>
    %11 = arith.mulf %10, %9 : vector<8x128xbf16>
    %12 = arith.addf %7, %11 : vector<8x128xbf16>
    %cst_6 = arith.constant 7.968750e-01 : bf16
    %13 = vector.broadcast %cst_6 : bf16 to vector<8x128xbf16>
    %14 = arith.mulf %13, %12 : vector<8x128xbf16>
    %15 = math.tanh %14 : vector<8x128xbf16>
    %cst_7 = arith.constant 1.000000e+00 : bf16
    %16 = vector.broadcast %cst_7 : bf16 to vector<8x128xbf16>
    %17 = arith.addf %16, %15 : vector<8x128xbf16>
    %cst_8 = arith.constant 5.000000e-01 : bf16
    %18 = vector.broadcast %cst_8 : bf16 to vector<8x128xbf16>
    %19 = arith.mulf %18, %17 : vector<8x128xbf16>
    %20 = arith.mulf %7, %19 : vector<8x128xbf16>
    %c0_9 = arith.constant 0 : index
    %c0_10 = arith.constant 0 : index
    %21 = vector.load %arg4[%c0_9, %c0_10] : memref<128x128xbf16, #tpu.memory_space<vmem>>, vector<128x128xbf16>
    %cst_11 = arith.constant dense<0.000000e+00> : vector<8x128xf32>
    %22 = tpu.matmul %20, %21, %cst_11 {dimension_numbers = #tpu.dot_dimension_numbers<[1], [0], [0], [1], [0, 0, 1, 1], [], []>} : vector<8x128xbf16>, vector<128x128xbf16>, vector<8x128xf32> -> vector<8x128xf32>
    %c0_12 = arith.constant 0 : index
    %c0_13 = arith.constant 0 : index
    %23 = vector.load %arg5[%c0_12, %c0_13] : memref<1x128xf32, #tpu.memory_space<vmem>>, vector<1x128xf32>
    %24 = vector.broadcast %23 : vector<1x128xf32> to vector<8x128xf32>
    %25 = arith.addf %22, %24 : vector<8x128xf32>
    %26 = arith.addf %25, %0 : vector<8x128xf32>
    %c0_14 = arith.constant 0 : index
    %c0_15 = arith.constant 0 : index
    %27 = vector.load %arg6[%c0_14, %c0_15] : memref<8x128xf32, #tpu.memory_space<vmem>>, vector<8x128xf32>
    tpu.vector_store %arg6[%c0_14, %c0_15], %26 {strides = array<i32>} : memref<8x128xf32, #tpu.memory_space<vmem>>, vector<8x128xf32>,
    return
  }
  func.func @transform_0(%arg0: i32) -> (i32, i32) {
    %c0_i32 = arith.constant 0 : i32
    %c0_i32_0 = arith.constant 0 : i32
    return %arg0, %c0_i32 : i32, i32
  }
  func.func @transform_1(%arg0: i32) -> (i32, i32) {
    %c0_i32 = arith.constant 0 : i32
    %c0_i32_0 = arith.constant 0 : i32
    %c0_i32_1 = arith.constant 0 : i32
    return %c0_i32, %c0_i32_0 : i32, i32
  }
  func.func @transform_2(%arg0: i32) -> (i32, i32) {
    %c0_i32 = arith.constant 0 : i32
    %c0_i32_0 = arith.constant 0 : i32
    %c0_i32_1 = arith.constant 0 : i32
    return %c0_i32, %c0_i32_0 : i32, i32
  }
  func.func @transform_3(%arg0: i32) -> (i32, i32) {
    %c0_i32 = arith.constant 0 : i32
    %c0_i32_0 = arith.constant 0 : i32
    %c0_i32_1 = arith.constant 0 : i32
    return %c0_i32, %c0_i32_0 : i32, i32
  }
  func.func @transform_4(%arg0: i32) -> (i32, i32) {
    %c0_i32 = arith.constant 0 : i32
    %c0_i32_0 = arith.constant 0 : i32
    %c0_i32_1 = arith.constant 0 : i32
    return %c0_i32, %c0_i32_0 : i32, i32
  }
  func.func @transform_5(%arg0: i32) -> (i32, i32) {
    %c0_i32 = arith.constant 0 : i32
    %c0_i32_0 = arith.constant 0 : i32
    return %arg0, %c0_i32 : i32, i32
  }
}

module attributes {stable_mosaic.version = 11 : i64} {
  func.func @_residual_mlp_kernel(%arg0: i32, %arg1: memref<8x128xf32, #tpu.memory_space<vmem>>, %arg2: memref<128x128xbf16, #tpu.memory_space<vmem>>, %arg3: memref<1x128xf32, #tpu.memory_space<vmem>>, %arg4: memref<128x128xbf16, #tpu.memory_space<vmem>>, %arg5: memref<1x128xf32, #tpu.memory_space<vmem>>, %arg6: memref<8x128xf32, #tpu.memory_space<vmem>>) attributes {dimension_semantics = [#tpu.dimension_semantics<parallel>], iteration_bounds = array<i64: 2>, scalar_prefetch = 0 : i64, scratch_operands = 0 : i64, tpu.core_type = #tpu.core_type<tc>, window_params = [{transform_indices = @transform_0, window_bounds = array<i64: 8, 128>}, {pipeline_mode = #tpu.pipeline_mode<synchronous>, transform_indices = @transform_1, window_bounds = array<i64: 128, 128>}, {pipeline_mode = #tpu.pipeline_mode<synchronous>, transform_indices = @transform_2, window_bounds = array<i64: 1, 128>}, {pipeline_mode = #tpu.pipeline_mode<synchronous>, transform_indices = @transform_3, window_bounds = array<i64: 128, 128>}, {pipeline_mode = #tpu.pipeline_mode<synchronous>, transform_indices = @transform_4, window_bounds = array<i64: 1, 128>}, {transform_indices = @transform_5, window_bounds = array<i64: 8, 128>}]} {
    %c0 = arith.constant 0 : index
    %c0_0 = arith.constant 0 : index
    %0 = vector.load %arg1[%c0, %c0_0] : memref<8x128xf32, #tpu.memory_space<vmem>>, vector<8x128xf32>
    %1 = arith.truncf %0 : vector<8x128xf32> to vector<8x128xbf16>
    %c0_1 = arith.constant 0 : index
    %c0_2 = arith.constant 0 : index
    %2 = vector.load %arg2[%c0_1, %c0_2] : memref<128x128xbf16, #tpu.memory_space<vmem>>, vector<128x128xbf16>
    %cst = arith.constant dense<0.000000e+00> : vector<8x128xf32>
    %3 = tpu.matmul %1, %2, %cst {dimension_numbers = #tpu.dot_dimension_numbers<[1], [0], [0], [1], [0, 0, 1, 1], [], []>} : vector<8x128xbf16>, vector<128x128xbf16>, vector<8x128xf32> -> vector<8x128xf32>
    %c0_3 = arith.constant 0 : index
    %c0_4 = arith.constant 0 : index
    %4 = vector.load %arg3[%c0_3, %c0_4] : memref<1x128xf32, #tpu.memory_space<vmem>>, vector<1x128xf32>
    %5 = vector.broadcast %4 : vector<1x128xf32> to vector<8x128xf32>
    %6 = arith.addf %3, %5 : vector<8x128xf32>
    %7 = arith.truncf %6 : vector<8x128xf32> to vector<8x128xbf16>
    %8 = arith.mulf %7, %7 : vector<8x128xbf16>
    %9 = arith.mulf %7, %8 : vector<8x128xbf16>
    %cst_5 = arith.constant 4.467770e-02 : bf16
    %10 = vector.broadcast %cst_5 : bf16 to vector<8x128xbf16>
    %11 = arith.mulf %10, %9 : vector<8x128xbf16>
    %12 = arith.addf %7, %11 : vector<8x128xbf16>
    %cst_6 = arith.constant 7.968750e-01 : bf16
    %13 = vector.broadcast %cst_6 : bf16 to vector<8x128xbf16>
    %14 = arith.mulf %13, %12 : vector<8x128xbf16>
    %15 = math.tanh %14 : vector<8x128xbf16>
    %cst_7 = arith.constant 1.000000e+00 : bf16
    %16 = vector.broadcast %cst_7 : bf16 to vector<8x128xbf16>
    %17 = arith.addf %16, %15 : vector<8x128xbf16>
    %cst_8 = arith.constant 5.000000e-01 : bf16
    %18 = vector.broadcast %cst_8 : bf16 to vector<8x128xbf16>
    %19 = arith.mulf %18, %17 : vector<8x128xbf16>
    %20 = arith.mulf %7, %19 : vector<8x128xbf16>
    %c0_9 = arith.constant 0 : index
    %c0_10 = arith.constant 0 : index
    %21 = vector.load %arg4[%c0_9, %c0_10] : memref<128x128xbf16, #tpu.memory_space<vmem>>, vector<128x128xbf16>
    %cst_11 = arith.constant dense<0.000000e+00> : vector<8x128xf32>
    %22 = tpu.matmul %20, %21, %cst_11 {dimension_numbers = #tpu.dot_dimension_numbers<[1], [0], [0], [1], [0, 0, 1, 1], [], []>} : vector<8x128xbf16>, vector<128x128xbf16>, vector<8x128xf32> -> vector<8x128xf32>
    %c0_12 = arith.constant 0 : index
    %c0_13 = arith.constant 0 : index
    %23 = vector.load %arg5[%c0_12, %c0_13] : memref<1x128xf32, #tpu.memory_space<vmem>>, vector<1x128xf32>
    %24 = vector.broadcast %23 : vector<1x128xf32> to vector<8x128xf32>
    %25 = arith.addf %22, %24 : vector<8x128xf32>
    %26 = arith.addf %25, %0 : vector<8x128xf32>
    %c0_14 = arith.constant 0 : index
    %c0_15 = arith.constant 0 : index
    %27 = vector.load %arg6[%c0_14, %c0_15] : memref<8x128xf32, #tpu.memory_space<vmem>>, vector<8x128xf32>
    tpu.vector_store %arg6[%c0_14, %c0_15], %26 {strides = array<i32>} : memref<8x128xf32, #tpu.memory_space<vmem>>, vector<8x128xf32>,
    return
  }
  func.func @transform_0(%arg0: i32) -> (i32, i32) {
    %c0_i32 = arith.constant 0 : i32
    %c0_i32_0 = arith.constant 0 : i32
    return %arg0, %c0_i32 : i32, i32
  }
  func.func @transform_1(%arg0: i32) -> (i32, i32) {
    %c0_i32 = arith.constant 0 : i32
    %c0_i32_0 = arith.constant 0 : i32
    %c0_i32_1 = arith.constant 0 : i32
    return %c0_i32, %c0_i32_0 : i32, i32
  }
  func.func @transform_2(%arg0: i32) -> (i32, i32) {
    %c0_i32 = arith.constant 0 : i32
    %c0_i32_0 = arith.constant 0 : i32
    %c0_i32_1 = arith.constant 0 : i32
    return %c0_i32, %c0_i32_0 : i32, i32
  }
  func.func @transform_3(%arg0: i32) -> (i32, i32) {
    %c0_i32 = arith.constant 0 : i32
    %c0_i32_0 = arith.constant 0 : i32
    %c0_i32_1 = arith.constant 0 : i32
    return %c0_i32, %c0_i32_0 : i32, i32
  }
  func.func @transform_4(%arg0: i32) -> (i32, i32) {
    %c0_i32 = arith.constant 0 : i32
    %c0_i32_0 = arith.constant 0 : i32
    %c0_i32_1 = arith.constant 0 : i32
    return %c0_i32, %c0_i32_0 : i32, i32
  }
  func.func @transform_5(%arg0: i32) -> (i32, i32) {
    %c0_i32 = arith.constant 0 : i32
    %c0_i32_0 = arith.constant 0 : i32
    return %arg0, %c0_i32 : i32, i32
  }
}

</mosaic_0001>

<llo_original>
// kernel: tpu_custom_call.1
$region0: #{tpu_custom_call.1}
  #allocation0 [shape = 'u32[]', space=smem, size = 0x4, offset = 0x4, fixed_abs, tag = 'smem constant byte address 0x4 - core index']
  #allocation1 [shape = 'u32[72,128]{1,0:T(1,128)}', space=vmem, size = 0x9000, scoped, tag = 'internal scratch']
  %s0 = inlined_call_operand.hbm [shape: f32[16,128], index: 0, kind: input, shape index: {}]
  %s1 = inlined_call_operand.hbm [shape: bf16[128,128], index: 1, kind: input, shape index: {}]
  %s2 = inlined_call_operand.vmem [shape: f32[1,128], index: 2, kind: input, shape index: {}]
  %s3 = inlined_call_operand.hbm [shape: bf16[128,128], index: 3, kind: input, shape index: {}]
  %s4 = inlined_call_operand.vmem [shape: f32[1,128], index: 4, kind: input, shape index: {}]
  %s5 = inlined_call_operand.hbm [shape: f32[16,128], index: 5, kind: output, shape index: {}]
  %s6 = sld [smem:[#allocation0]]
  $region65: #{tpu_custom_call.1} parent=0
    _
  %s8 = ssub.s32 1, %s6
  %s9 = scalar_select 0, %s8, %s6
  $region1: #{tpu_custom_call.1} parent=0
    #allocation2 [shape = 'u8[8192]{0}', space=vmem, size = 0x2000, scoped, tag = 'input window, operand 0']
    #allocation3 [shape = 's32[2]{0}', space=sflag, size = 0x8, scoped, tag = 'scoped memory for tpu_custom_call.1']
    #allocation4 [shape = 's32[2]{0}', space=sflag, size = 0x8, scoped, tag = 'scoped memory for tpu_custom_call.1']
    #allocation5 [shape = 'u8[32768]{0}', space=vmem, size = 0x8000, scoped, tag = 'input window, operand 1, single buffered']
    #allocation6 [shape = 's32[1]{0}', space=sflag, size = 0x4, scoped, tag = 'scoped memory for tpu_custom_call.1']
    #allocation7 [shape = 'u8[32768]{0}', space=vmem, size = 0x8000, scoped, tag = 'input window, operand 3, single buffered']
    #allocation8 [shape = 'u8[8192]{0}', space=vmem, size = 0x2000, scoped, tag = 'output window, operand 0']
    %10 = vsyncpa [#allocation3], 0
    %s11 = scalar_lea.sflag [#allocation3], 1
    %12 = vsyncpa %s11, 0
    %13 = vsyncpa [#allocation6], 0
    %14 = vsyncpa [#allocation4], 0
    %s15 = scalar_lea.sflag [#allocation4], 1
    %16 = vsyncpa %s15, 0
    loop: start=0, step=1, limit=4
    $region2: #{tpu_custom_call.1} parent=1 // loop_pre_header
      _
    $region3: #{tpu_custom_call.1} parent=1 // loop_header
      %s18 = sphi 0, %s22
      %p19 = scmp.ge.s32.totalorder %s18, 4
      %s28 = sphi 0, %s30
      %s31 = sphi 0, %s28
      %s32 = sphi 0, %s31
      %s48 = sphi 0, %s32
      %s52 = sphi 0, %s52
      %s54 = sphi 0, %s52
      %s55 = sphi 0, %s54
      %s69 = sphi 0, %s55
      %s73 = sphi 0, %s73
      %s75 = sphi 0, %s73
      %s76 = sphi 0, %s75
      %s90 = sphi 0, %s76
      %s94 = sphi 0, %s94
      %s96 = sphi 0, %s94
      %s97 = sphi 0, %s96
      %s111 = sphi 0, %s97
      %s115 = sphi 0, %s115
      %s117 = sphi 0, %s115
      %s118 = sphi 0, %s117
      %s132 = sphi 0, %s118
      %s138 = sphi 0, %s140
      %s141 = sphi 0, %s138
      %s142 = sphi 0, %s141
      %s158 = sphi 0, %s142
    $region4: #{tpu_custom_call.1} parent=1 // loop_header_branch
      %21 = sbr.rel (%p19) target = $region8
    $region5: #{tpu_custom_call.1} parent=1 // loop_body
      %s23 = ssub.s32 %s18, 1
      %s24 = ssub.s32 %s18, 2
      %s25 = sadd.s32 %s18, 1
      %s26 = ssub.s32 %s18, %s25
      %p27 = scmp.eq.s32.totalorder %s26, 0
      %s29 = sadd.s32 %s28, 1
      %s30 = scalar_select %p27, %s28, %s29
      %p33 = pneg %p27
      %p34 = scmp.eq.s32.totalorder %s18, 1
      %p35 = por %p33, %p34
      %p36 = scmp.ne.s32.totalorder %s28, %s31
      %p37 = scmp.eq.s32.totalorder %s18, 0
      %p38 = por %p36, %p37
      %p39 = scmp.ne.s32.totalorder %s28, %s31
      %p40 = scmp.eq.s32.totalorder %s23, 1
      %p41 = por %p39, %p40
      %p42 = scmp.ne.s32.totalorder %s31, %s32
      %p43 = scmp.eq.s32.totalorder %s23, 0
      %p44 = por %p42, %p43
      %p45 = scmp.ne.s32.totalorder %s31, %s32
      %p46 = scmp.eq.s32.totalorder %s24, 1
      %p47 = por %p45, %p46
      %p49 = scmp.ne.s32.totalorder %s32, %s48
      %p50 = scmp.eq.s32.totalorder %s24, 0
      %p51 = por %p49, %p50
      %s53 = sadd.s32 %s52, 1
      %p56 = scmp.eq.s32.totalorder %s18, 1
      %p57 = scmp.ne.s32.totalorder %s52, %s54
      %p58 = scmp.eq.s32.totalorder %s18, 0
      %p59 = por %p57, %p58
      %p60 = scmp.ne.s32.totalorder %s52, %s54
      %p61 = scmp.eq.s32.totalorder %s23, 1
      %p62 = por %p60, %p61
      %p63 = scmp.ne.s32.totalorder %s54, %s55
      %p64 = scmp.eq.s32.totalorder %s23, 0
      %p65 = por %p63, %p64
      %p66 = scmp.ne.s32.totalorder %s54, %s55
      %p67 = scmp.eq.s32.totalorder %s24, 1
      %p68 = por %p66, %p67
      %p70 = scmp.ne.s32.totalorder %s55, %s69
      %p71 = scmp.eq.s32.totalorder %s24, 0
      %p72 = por %p70, %p71
      %s74 = sadd.s32 %s73, 1
      %p77 = scmp.eq.s32.totalorder %s18, 1
      %p78 = scmp.ne.s32.totalorder %s73, %s75
      %p79 = scmp.eq.s32.totalorder %s18, 0
      %p80 = por %p78, %p79
      %p81 = scmp.ne.s32.totalorder %s73, %s75
      %p82 = scmp.eq.s32.totalorder %s23, 1
      %p83 = por %p81, %p82
      %p84 = scmp.ne.s32.totalorder %s75, %s76
      %p85 = scmp.eq.s32.totalorder %s23, 0
      %p86 = por %p84, %p85
      %p87 = scmp.ne.s32.totalorder %s75, %s76
      %p88 = scmp.eq.s32.totalorder %s24, 1
      %p89 = por %p87, %p88
      %p91 = scmp.ne.s32.totalorder %s76, %s90
      %p92 = scmp.eq.s32.totalorder %s24, 0
      %p93 = por %p91, %p92
      %s95 = sadd.s32 %s94, 1
      %p98 = scmp.eq.s32.totalorder %s18, 1
      %p99 = scmp.ne.s32.totalorder %s94, %s96
      %p100 = scmp.eq.s32.totalorder %s18, 0
      %p101 = por %p99, %p100
      %p102 = scmp.ne.s32.totalorder %s94, %s96
      %p103 = scmp.eq.s32.totalorder %s23, 1
      %p104 = por %p102, %p103
      %p105 = scmp.ne.s32.totalorder %s96, %s97
      %p106 = scmp.eq.s32.totalorder %s23, 0
      %p107 = por %p105, %p106
      %p108 = scmp.ne.s32.totalorder %s96, %s97
      %p109 = scmp.eq.s32.totalorder %s24, 1
      %p110 = por %p108, %p109
      %p112 = scmp.ne.s32.totalorder %s97, %s111
      %p113 = scmp.eq.s32.totalorder %s24, 0
      %p114 = por %p112, %p113
      %s116 = sadd.s32 %s115, 1
      %p119 = scmp.eq.s32.totalorder %s18, 1
      %p120 = scmp.ne.s32.totalorder %s115, %s117
      %p121 = scmp.eq.s32.totalorder %s18, 0
      %p122 = por %p120, %p121
      %p123 = scmp.ne.s32.totalorder %s115, %s117
      %p124 = scmp.eq.s32.totalorder %s23, 1
      %p125 = por %p123, %p124
      %p126 = scmp.ne.s32.totalorder %s117, %s118
      %p127 = scmp.eq.s32.totalorder %s23, 0
      %p128 = por %p126, %p127
      %p129 = scmp.ne.s32.totalorder %s117, %s118
      %p130 = scmp.eq.s32.totalorder %s24, 1
      %p131 = por %p129, %p130
      %p133 = scmp.ne.s32.totalorder %s118, %s132
      %p134 = scmp.eq.s32.totalorder %s24, 0
      %p135 = por %p133, %p134
      %s136 = ssub.s32 %s18, %s25
      %p137 = scmp.eq.s32.totalorder %s136, 0
      %s139 = sadd.s32 %s138, 1
      %s140 = scalar_select %p137, %s138, %s139
      %p143 = pneg %p137
      %p144 = scmp.eq.s32.totalorder %s18, 1
      %p145 = por %p143, %p144
      %p146 = scmp.ne.s32.totalorder %s138, %s141
      %p147 = scmp.eq.s32.totalorder %s18, 0
      %p148 = por %p146, %p147
      %p149 = scmp.ne.s32.totalorder %s138, %s141
      %p150 = scmp.eq.s32.totalorder %s23, 1
      %p151 = por %p149, %p150
      %p152 = scmp.ne.s32.totalorder %s141, %s142
      %p153 = scmp.eq.s32.totalorder %s23, 0
      %p154 = por %p152, %p153
      %p155 = scmp.ne.s32.totalorder %s141, %s142
      %p156 = scmp.eq.s32.totalorder %s24, 1
      %p157 = por %p155, %p156
      %p159 = scmp.ne.s32.totalorder %s142, %s158
      %p160 = scmp.eq.s32.totalorder %s24, 0
      %p161 = por %p159, %p160
      %p162 = scmp.le.s32.totalorder 1, %s18
      %p163 = scmp.lt.s32.totalorder %s18, 3
      %p164 = pnand %p162, %p163
      %p165 = pneg %p164
      // Predicated region
      $region9: #{tpu_custom_call.1} parent=5 // pred_check
        _
      $region10: #{tpu_custom_call.1} parent=5 // pred_check_branch
        %167 = sbr.rel (%p164) target = $region12
      $region11: #{tpu_custom_call.1} parent=5 // pred_region
        %s168 = ssub.s32 %s18, 1
        // Predicated region
        $region13: #{tpu_custom_call.1} parent=11 // pred_check
          %p169 = pneg %p65
        $region14: #{tpu_custom_call.1} parent=11 // pred_check_branch
          %171 = sbr.rel (%p169) target = $region16
        $region15: #{tpu_custom_call.1} parent=11 // pred_region
          %173 = vsyncadd [#allocation6], 0
          %s174 = sshll.u32 %s1, 4
          %s175 = int_to_ptr.hbm [resolvable:$true] %s174
          %s176 = sshll.u32 [#allocation5], 4
          %s177 = int_to_ptr.vmem [resolvable:$true] %s176
          %182 = dma.hbm_to_vmem [thread:$0]  %s175, 1024, %s177, [#allocation6], 64, 64, 4
        $region16: #{tpu_custom_call.1} parent=11 // pred_fallthru
          _
        // Predicated region
        $region17: #{tpu_custom_call.1} parent=11 // pred_check
          %p183 = pneg %p86
        $region18: #{tpu_custom_call.1} parent=11 // pred_check_branch
          %185 = sbr.rel (%p183) target = $region20
        $region19: #{tpu_custom_call.1} parent=11 // pred_region
          _
        $region20: #{tpu_custom_call.1} parent=11 // pred_fallthru
          _
        // Predicated region
        $region21: #{tpu_custom_call.1} parent=11 // pred_check
          %p186 = pneg %p107
        $region22: #{tpu_custom_call.1} parent=11 // pred_check_branch
          %188 = sbr.rel (%p186) target = $region24
        $region23: #{tpu_custom_call.1} parent=11 // pred_region
          %190 = vsyncadd [#allocation6], 0
          %s191 = sshll.u32 %s3, 4
          %s192 = int_to_ptr.hbm [resolvable:$true] %s191
          %s193 = sshll.u32 [#allocation7], 4
          %s194 = int_to_ptr.vmem [resolvable:$true] %s193
          %199 = dma.hbm_to_vmem [thread:$0]  %s192, 1024, %s194, [#allocation6], 64, 64, 4
        $region24: #{tpu_custom_call.1} parent=11 // pred_fallthru
          _
        // Predicated region
        $region25: #{tpu_custom_call.1} parent=11 // pred_check
          %p200 = pneg %p128
        $region26: #{tpu_custom_call.1} parent=11 // pred_check_branch
          %202 = sbr.rel (%p200) target = $region28
        $region27: #{tpu_custom_call.1} parent=11 // pred_region
          _
        $region28: #{tpu_custom_call.1} parent=11 // pred_fallthru
          _
      $region12: #{tpu_custom_call.1} parent=5 // pred_fallthru
        _
      %p203 = scmp.lt.s32.totalorder %s18, 2
      // Predicated region
      $region29: #{tpu_custom_call.1} parent=5 // pred_check
        %p204 = pneg %p203
      $region30: #{tpu_custom_call.1} parent=5 // pred_check_branch
        %206 = sbr.rel (%p204) target = $region32
      $region31: #{tpu_custom_call.1} parent=5 // pred_region
        // Predicated region
        $region33: #{tpu_custom_call.1} parent=31 // pred_check
          %p207 = pneg %p38
        $region34: #{tpu_custom_call.1} parent=31 // pred_check_branch
          %209 = sbr.rel (%p207) target = $region36
        $region35: #{tpu_custom_call.1} parent=31 // pred_region
          %s210 = sand.u32 %s28, 1
          %s211 = scalar_lea.sflag [#allocation3], %s210
          %s212 = sand.u32 %s28, 1
          %s213 = smul.addr %s212, 8
          %s214 = scalar_lea.vmem [#allocation2], %s213
          %216 = vsyncadd %s211, 0
          %s217 = smul.addr %s18, 8
          %s218 = scalar_lea.hbm %s0, %s217
          %s220 = sshll.u32 %s218, 4
          %s221 = int_to_ptr.hbm [resolvable:$true] %s220
          %s222 = sshll.u32 %s214, 4
          %s223 = int_to_ptr.vmem [resolvable:$true] %s222
          %225 = dma.hbm_to_vmem [thread:$0]  %s221, 128, %s223, %s211
        $region36: #{tpu_custom_call.1} parent=31 // pred_fallthru
          _
      $region32: #{tpu_custom_call.1} parent=5 // pred_fallthru
        _
      %p226 = scmp.le.s32.totalorder 1, %s18
      %p227 = scmp.lt.s32.totalorder %s18, 3
      %p228 = pnand %p226, %p227
      %p229 = pneg %p228
      // Predicated region
      $region37: #{tpu_custom_call.1} parent=5 // pred_check
        _
      $region38: #{tpu_custom_call.1} parent=5 // pred_check_branch
        %231 = sbr.rel (%p228) target = $region40
      $region39: #{tpu_custom_call.1} parent=5 // pred_region
        %s232 = ssub.s32 %s18, 1
        %s233 = sand.u32 %s31, 1
        %s234 = scalar_lea.sflag [#allocation3], %s233
        %s235 = sand.u32 %s31, 1
        %s236 = smul.addr %s235, 8
        %s237 = scalar_lea.vmem [#allocation2], %s236
        // Predicated region
        $region41: #{tpu_custom_call.1} parent=39 // pred_check
          %p238 = pneg %p44
        $region42: #{tpu_custom_call.1} parent=39 // pred_check_branch
          %240 = sbr.rel (%p238) target = $region44
        $region43: #{tpu_custom_call.1} parent=39 // pred_region
          %242 = dma.done %s234, 128
        $region44: #{tpu_custom_call.1} parent=39 // pred_fallthru
          _
        // Predicated region
        $region45: #{tpu_custom_call.1} parent=39 // pred_check
          %p243 = pneg %p65
        $region46: #{tpu_custom_call.1} parent=39 // pred_check_branch
          %245 = sbr.rel (%p243) target = $region48
        $region47: #{tpu_custom_call.1} parent=39 // pred_region
          %247 = dma.done [#allocation6], 1024
        $region48: #{tpu_custom_call.1} parent=39 // pred_fallthru
          _
        // Predicated region
        $region49: #{tpu_custom_call.1} parent=39 // pred_check
          %p248 = pneg %p107
        $region50: #{tpu_custom_call.1} parent=39 // pred_check_branch
          %250 = sbr.rel (%p248) target = $region52
        $region51: #{tpu_custom_call.1} parent=39 // pred_region
          %252 = dma.done [#allocation6], 1024
        $region52: #{tpu_custom_call.1} parent=39 // pred_fallthru
          _
        %s253 = sand.u32 %s31, 1
        %s254 = scalar_lea.sflag [#allocation3], %s253
        %s255 = sand.u32 %s31, 1
        %s256 = smul.addr %s255, 8
        %s257 = scalar_lea.vmem [#allocation2], %s256
        %p258 = pneg %p44
        %p259 = pneg %p41
        %p260 = pneg %p65
        %p261 = pneg %p62
        %p262 = pneg %p86
        %p263 = pneg %p83
        %p264 = pneg %p107
        %p265 = pneg %p104
        %p266 = pneg %p128
        %p267 = pneg %p125
        %p268 = pneg %p154
        %p269 = pneg %p151
        %s270 = sand.u32 %s141, 1
        %s271 = scalar_lea.sflag [#allocation4], %s270
        %s272 = sand.u32 %s141, 1
        %s273 = smul.addr %s272, 8
        %s274 = scalar_lea.vmem [#allocation8], %s273
        %v275 = vld [vmem:[%s237] sm:$0xff]
        %v276 = vpack.c.bf16 %v275, %v275
        %v277 = vld [vmem:[#allocation5] sm:$0xf]
        %v278 = vld [vmem:[#allocation5 + $0x4] sm:$0xf]
        %v279 = vld [vmem:[#allocation5 + $0x8] sm:$0xf]
        %v280 = vld [vmem:[#allocation5 + $0xc] sm:$0xf]
        %v281 = vld [vmem:[#allocation5 + $0x10] sm:$0xf]
        %v282 = vld [vmem:[#allocation5 + $0x14] sm:$0xf]
        %v283 = vld [vmem:[#allocation5 + $0x18] sm:$0xf]
        %v284 = vld [vmem:[#allocation5 + $0x1c] sm:$0xf]
        %v285 = vld [vmem:[#allocation5 + $0x20] sm:$0xf]
        %v286 = vld [vmem:[#allocation5 + $0x24] sm:$0xf]
        %v287 = vld [vmem:[#allocation5 + $0x28] sm:$0xf]
        %v288 = vld [vmem:[#allocation5 + $0x2c] sm:$0xf]
        %v289 = vld [vmem:[#allocation5 + $0x30] sm:$0xf]
        %v290 = vld [vmem:[#allocation5 + $0x34] sm:$0xf]
        %v291 = vld [vmem:[#allocation5 + $0x38] sm:$0xf]
        %v292 = vld [vmem:[#allocation5 + $0x3c] sm:$0xf]
        %v293 = vld [vmem:[%s2] sm:$0x1]
        %v295 = vperm.slane %v293, 0
        %v313 = vunpack.c.l.b16 %v277
        %v314 = vunpack.c.l.b16 %v278
        %v315 = vunpack.c.l.b16 %v279
        %v316 = vunpack.c.l.b16 %v280
        %v317 = vunpack.c.l.b16 %v281
        %v318 = vunpack.c.l.b16 %v282
        %v319 = vunpack.c.l.b16 %v283
        %v320 = vunpack.c.l.b16 %v284
        %v321 = vunpack.c.l.b16 %v285
        %v322 = vunpack.c.l.b16 %v286
        %v323 = vunpack.c.l.b16 %v287
        %v324 = vunpack.c.l.b16 %v288
        %v325 = vunpack.c.l.b16 %v289
        %v326 = vunpack.c.l.b16 %v290
        %v327 = vunpack.c.l.b16 %v291
        %v328 = vunpack.c.l.b16 %v292
        %v329 = vpack.c.b16 %v314, %v313
        %v330 = vpack.c.b16 %v316, %v315
        %v331 = vpack.c.b16 %v318, %v317
        %v332 = vpack.c.b16 %v320, %v319
        %v333 = vpack.c.b16 %v322, %v321
        %v334 = vpack.c.b16 %v324, %v323
        %v335 = vpack.c.b16 %v326, %v325
        %v336 = vpack.c.b16 %v328, %v327
        %345 = vmatpush.bf16.msra.mxu0 %v336
        %346 = vmatpush.bf16.msra.mxu0 %v335
        %347 = vmatpush.bf16.msra.mxu0 %v334
        %348 = vmatpush.bf16.msra.mxu0 %v333
        %349 = vmatpush.bf16.msra.mxu0 %v332
        %350 = vmatpush.bf16.msra.mxu0 %v331
        %351 = vmatpush.bf16.msra.mxu0 %v330
        %352 = vmatpush.bf16.msra.mxu0 %v329
        %353 = vmatmul.bf16.gmra.mxu0 %v276
        %v354 = vpop.f32.mrf.mxu0
        %v355 = vadd.f32 %v295, %v354
        %v356 = vpop.f32.mrf.mxu0
        %357 = vdwg.mxu0
        %v358 = vpack.c.bf16 %v355, %v355
        %v359 = vunpack.c.l.bf16 %v358
        %v360 = vmul.f32 %v359, %v359
        %v361 = vpack.c.bf16 %v360, %v360
        %v362 = vunpack.c.l.bf16 %v361
        %v363 = vmul.f32 %v359, %v362
        %v364 = vpack.c.bf16 %v363, %v363
        %v365 = vunpack.c.l.bf16 %v364
        %v366 = vmul.f32 %v365, 0.044677734
        %v367 = vpack.c.bf16 %v366, %v366
        %v368 = vunpack.c.l.bf16 %v367
        %v369 = vadd.f32 %v359, %v368
        %v370 = vpack.c.bf16 %v369, %v369
        %v371 = vunpack.c.l.bf16 %v370
        %v372 = vmul.f32 %v371, 0.796875
        %v373 = vpack.c.bf16 %v372, %v372
        %v374 = vunpack.c.l.bf16 %v373
        %v375 = vtanh.pop %v374
        %v376 = vpack.c.bf16 %v375, %v375
        %v377 = vunpack.c.l.bf16 %v376
        %v378 = vadd.f32 %v377, 1.0
        %v379 = vpack.c.bf16 %v378, %v378
        %v380 = vunpack.c.l.bf16 %v379
        %v381 = vmul.f32 %v380, 0.5
        %v382 = vpack.c.bf16 %v381, %v381
        %v383 = vunpack.c.l.bf16 %v382
        %v384 = vmul.f32 %v359, %v383
        %v385 = vpack.c.bf16 %v384, %v384
        %v386 = vld [vmem:[#allocation7] sm:$0xf]
        %v387 = vld [vmem:[#allocation7 + $0x4] sm:$0xf]
        %v388 = vld [vmem:[#allocation7 + $0x8] sm:$0xf]
        %v389 = vld [vmem:[#allocation7 + $0xc] sm:$0xf]
        %v390 = vld [vmem:[#allocation7 + $0x10] sm:$0xf]
        %v391 = vld [vmem:[#allocation7 + $0x14] sm:$0xf]
        %v392 = vld [vmem:[#allocation7 + $0x18] sm:$0xf]
        %v393 = vld [vmem:[#allocation7 + $0x1c] sm:$0xf]
        %v394 = vld [vmem:[#allocation7 + $0x20] sm:$0xf]
        %v395 = vld [vmem:[#allocation7 + $0x24] sm:$0xf]
        %v396 = vld [vmem:[#allocation7 + $0x28] sm:$0xf]
        %v397 = vld [vmem:[#allocation7 + $0x2c] sm:$0xf]
        %v398 = vld [vmem:[#allocation7 + $0x30] sm:$0xf]
        %v399 = vld [vmem:[#allocation7 + $0x34] sm:$0xf]
        %v400 = vld [vmem:[#allocation7 + $0x38] sm:$0xf]
        %v401 = vld [vmem:[#allocation7 + $0x3c] sm:$0xf]
        %v402 = vld [vmem:[%s4] sm:$0x1]
        %v404 = vperm.slane %v402, 0
        %v422 = vunpack.c.l.b16 %v386
        %v423 = vunpack.c.l.b16 %v387
        %v424 = vunpack.c.l.b16 %v388
        %v425 = vunpack.c.l.b16 %v389
        %v426 = vunpack.c.l.b16 %v390
        %v427 = vunpack.c.l.b16 %v391
        %v428 = vunpack.c.l.b16 %v392
        %v429 = vunpack.c.l.b16 %v393
        %v430 = vunpack.c.l.b16 %v394
        %v431 = vunpack.c.l.b16 %v395
        %v432 = vunpack.c.l.b16 %v396
        %v433 = vunpack.c.l.b16 %v397
        %v434 = vunpack.c.l.b16 %v398
        %v435 = vunpack.c.l.b16 %v399
        %v436 = vunpack.c.l.b16 %v400
        %v437 = vunpack.c.l.b16 %v401
        %v438 = vpack.c.b16 %v423, %v422
        %v439 = vpack.c.b16 %v425, %v424
        %v440 = vpack.c.b16 %v427, %v426
        %v441 = vpack.c.b16 %v429, %v428
        %v442 = vpack.c.b16 %v431, %v430
        %v443 = vpack.c.b16 %v433, %v432
        %v444 = vpack.c.b16 %v435, %v434
        %v445 = vpack.c.b16 %v437, %v436
        %454 = vmatpush.bf16.msra.mxu0 %v445
        %455 = vmatpush.bf16.msra.mxu0 %v444
        %456 = vmatpush.bf16.msra.mxu0 %v443
        %457 = vmatpush.bf16.msra.mxu0 %v442
        %458 = vmatpush.bf16.msra.mxu0 %v441
        %459 = vmatpush.bf16.msra.mxu0 %v440
        %460 = vmatpush.bf16.msra.mxu0 %v439
        %461 = vmatpush.bf16.msra.mxu0 %v438
        %462 = vmatmul.bf16.gmra.mxu0 %v385
        %v463 = vpop.f32.mrf.mxu0
        %v464 = vadd.f32 %v404, %v463
        %v465 = vpop.f32.mrf.mxu0
        %466 = vdwg.mxu0
        %v467 = vadd.f32 %v464, %v275
        %468 = vst [vmem:[%s274] sm:$0xff] %v467
        %s469 = sand.u32 %s141, 1
        %s470 = scalar_lea.sflag [#allocation4], %s469
        %s471 = sand.u32 %s141, 1
        %s472 = smul.addr %s471, 8
        %s473 = scalar_lea.vmem [#allocation8], %s472
        // Predicated region
        $region53: #{tpu_custom_call.1} parent=39 // pred_check
          %p474 = pneg %p151
        $region54: #{tpu_custom_call.1} parent=39 // pred_check_branch
          %476 = sbr.rel (%p474) target = $region56
        $region55: #{tpu_custom_call.1} parent=39 // pred_region
          %478 = vsyncadd %s470, 0
          %s479 = smul.addr %s23, 8
          %s480 = scalar_lea.hbm %s5, %s479
          %s482 = sshll.u32 %s473, 4
          %s483 = int_to_ptr.vmem [resolvable:$true] %s482
          %s484 = sshll.u32 %s480, 4
          %s485 = int_to_ptr.hbm [resolvable:$true] %s484
          %487 = dma.vmem_to_hbm [thread:$0]  %s483, 128, %s485, %s470
        $region56: #{tpu_custom_call.1} parent=39 // pred_fallthru
          _
      $region40: #{tpu_custom_call.1} parent=5 // pred_fallthru
        _
      %p488 = scmp.le.s32.totalorder 2, %s18
      // Predicated region
      $region57: #{tpu_custom_call.1} parent=5 // pred_check
        %p489 = pneg %p488
      $region58: #{tpu_custom_call.1} parent=5 // pred_check_branch
        %491 = sbr.rel (%p489) target = $region60
      $region59: #{tpu_custom_call.1} parent=5 // pred_region
        %s492 = ssub.s32 %s18, 2
        // Predicated region
        $region61: #{tpu_custom_call.1} parent=59 // pred_check
          %p493 = pneg %p157
        $region62: #{tpu_custom_call.1} parent=59 // pred_check_branch
          %495 = sbr.rel (%p493) target = $region64
        $region63: #{tpu_custom_call.1} parent=59 // pred_region
          %s496 = sand.u32 %s142, 1
          %s497 = scalar_lea.sflag [#allocation4], %s496
          %s498 = sand.u32 %s142, 1
          %s499 = smul.addr %s498, 8
          %s500 = scalar_lea.vmem [#allocation8], %s499
          %502 = dma.done %s497, 128
        $region64: #{tpu_custom_call.1} parent=59 // pred_fallthru
          _
      $region60: #{tpu_custom_call.1} parent=5 // pred_fallthru
        _
    $region6: #{tpu_custom_call.1} parent=1 // loop_footer
      %s22 = sadd.s32 1, %s18
    $region7: #{tpu_custom_call.1} parent=1 // loop_footer_branch
      %17 = sbr.rel target = $region3
    $region8: #{tpu_custom_call.1} parent=1 // loop_exit
      _
    %503 = vsyncpa [#allocation3], 1
    %s504 = scalar_lea.sflag [#allocation3], 1
    %505 = vsyncpa %s504, 1
    %506 = vsyncpa [#allocation6], 1
    %507 = vsyncpa [#allocation4], 1
    %s508 = scalar_lea.sflag [#allocation4], 1
    %509 = vsyncpa %s508, 1

// kernel: tpu_custom_call.1
$region0: #{tpu_custom_call.1}
  #allocation0 [shape = 'u32[]', space=smem, size = 0x4, offset = 0x4, fixed_abs, tag = 'smem constant byte address 0x4 - core index']
  #allocation1 [shape = 'u32[72,128]{1,0:T(1,128)}', space=vmem, size = 0x9000, scoped, tag = 'internal scratch']
  %s0 = inlined_call_operand.hbm [shape: f32[16,128], index: 0, kind: input, shape index: {}]
  %s1 = inlined_call_operand.hbm [shape: bf16[128,128], index: 1, kind: input, shape index: {}]
  %s2 = inlined_call_operand.vmem [shape: f32[1,128], index: 2, kind: input, shape index: {}]
  %s3 = inlined_call_operand.hbm [shape: bf16[128,128], index: 3, kind: input, shape index: {}]
  %s4 = inlined_call_operand.vmem [shape: f32[1,128], index: 4, kind: input, shape index: {}]
  %s5 = inlined_call_operand.hbm [shape: f32[16,128], index: 5, kind: output, shape index: {}]
  %s6 = sld [smem:[#allocation0]]
  $region65: #{tpu_custom_call.1} parent=0
    _
  %s8 = ssub.s32 1, %s6
  %s9 = scalar_select 0, %s8, %s6
  $region1: #{tpu_custom_call.1} parent=0
    #allocation2 [shape = 'u8[8192]{0}', space=vmem, size = 0x2000, scoped, tag = 'input window, operand 0']
    #allocation3 [shape = 's32[2]{0}', space=sflag, size = 0x8, scoped, tag = 'scoped memory for tpu_custom_call.1']
    #allocation4 [shape = 's32[2]{0}', space=sflag, size = 0x8, scoped, tag = 'scoped memory for tpu_custom_call.1']
    #allocation5 [shape = 'u8[32768]{0}', space=vmem, size = 0x8000, scoped, tag = 'input window, operand 1, single buffered']
    #allocation6 [shape = 's32[1]{0}', space=sflag, size = 0x4, scoped, tag = 'scoped memory for tpu_custom_call.1']
    #allocation7 [shape = 'u8[32768]{0}', space=vmem, size = 0x8000, scoped, tag = 'input window, operand 3, single buffered']
    #allocation8 [shape = 'u8[8192]{0}', space=vmem, size = 0x2000, scoped, tag = 'output window, operand 0']
    %10 = vsyncpa [#allocation3], 0
    %s11 = scalar_lea.sflag [#allocation3], 1
    %12 = vsyncpa %s11, 0
    %13 = vsyncpa [#allocation6], 0
    %14 = vsyncpa [#allocation4], 0
    %s15 = scalar_lea.sflag [#allocation4], 1
    %16 = vsyncpa %s15, 0
    loop: start=0, step=1, limit=4
    $region2: #{tpu_custom_call.1} parent=1 // loop_pre_header
      _
    $region3: #{tpu_custom_call.1} parent=1 // loop_header
      %s18 = sphi 0, %s22
      %p19 = scmp.ge.s32.totalorder %s18, 4
      %s28 = sphi 0, %s30
      %s31 = sphi 0, %s28
      %s32 = sphi 0, %s31
      %s48 = sphi 0, %s32
      %s52 = sphi 0, %s52
      %s54 = sphi 0, %s52
      %s55 = sphi 0, %s54
      %s69 = sphi 0, %s55
      %s73 = sphi 0, %s73
      %s75 = sphi 0, %s73
      %s76 = sphi 0, %s75
      %s90 = sphi 0, %s76
      %s94 = sphi 0, %s94
      %s96 = sphi 0, %s94
      %s97 = sphi 0, %s96
      %s111 = sphi 0, %s97
      %s115 = sphi 0, %s115
      %s117 = sphi 0, %s115
      %s118 = sphi 0, %s117
      %s132 = sphi 0, %s118
      %s138 = sphi 0, %s140
      %s141 = sphi 0, %s138
      %s142 = sphi 0, %s141
      %s158 = sphi 0, %s142
    $region4: #{tpu_custom_call.1} parent=1 // loop_header_branch
      %21 = sbr.rel (%p19) target = $region8
    $region5: #{tpu_custom_call.1} parent=1 // loop_body
      %s23 = ssub.s32 %s18, 1
      %s24 = ssub.s32 %s18, 2
      %s25 = sadd.s32 %s18, 1
      %s26 = ssub.s32 %s18, %s25
      %p27 = scmp.eq.s32.totalorder %s26, 0
      %s29 = sadd.s32 %s28, 1
      %s30 = scalar_select %p27, %s28, %s29
      %p33 = pneg %p27
      %p34 = scmp.eq.s32.totalorder %s18, 1
      %p35 = por %p33, %p34
      %p36 = scmp.ne.s32.totalorder %s28, %s31
      %p37 = scmp.eq.s32.totalorder %s18, 0
      %p38 = por %p36, %p37
      %p39 = scmp.ne.s32.totalorder %s28, %s31
      %p40 = scmp.eq.s32.totalorder %s23, 1
      %p41 = por %p39, %p40
      %p42 = scmp.ne.s32.totalorder %s31, %s32
      %p43 = scmp.eq.s32.totalorder %s23, 0
      %p44 = por %p42, %p43
      %p45 = scmp.ne.s32.totalorder %s31, %s32
      %p46 = scmp.eq.s32.totalorder %s24, 1
      %p47 = por %p45, %p46
      %p49 = scmp.ne.s32.totalorder %s32, %s48
      %p50 = scmp.eq.s32.totalorder %s24, 0
      %p51 = por %p49, %p50
      %s53 = sadd.s32 %s52, 1
      %p56 = scmp.eq.s32.totalorder %s18, 1
      %p57 = scmp.ne.s32.totalorder %s52, %s54
      %p58 = scmp.eq.s32.totalorder %s18, 0
      %p59 = por %p57, %p58
      %p60 = scmp.ne.s32.totalorder %s52, %s54
      %p61 = scmp.eq.s32.totalorder %s23, 1
      %p62 = por %p60, %p61
      %p63 = scmp.ne.s32.totalorder %s54, %s55
      %p64 = scmp.eq.s32.totalorder %s23, 0
      %p65 = por %p63, %p64
      %p66 = scmp.ne.s32.totalorder %s54, %s55
      %p67 = scmp.eq.s32.totalorder %s24, 1
      %p68 = por %p66, %p67
      %p70 = scmp.ne.s32.totalorder %s55, %s69
      %p71 = scmp.eq.s32.totalorder %s24, 0
      %p72 = por %p70, %p71
      %s74 = sadd.s32 %s73, 1
      %p77 = scmp.eq.s32.totalorder %s18, 1
      %p78 = scmp.ne.s32.totalorder %s73, %s75
      %p79 = scmp.eq.s32.totalorder %s18, 0
      %p80 = por %p78, %p79
      %p81 = scmp.ne.s32.totalorder %s73, %s75
      %p82 = scmp.eq.s32.totalorder %s23, 1
      %p83 = por %p81, %p82
      %p84 = scmp.ne.s32.totalorder %s75, %s76
      %p85 = scmp.eq.s32.totalorder %s23, 0
      %p86 = por %p84, %p85
      %p87 = scmp.ne.s32.totalorder %s75, %s76
      %p88 = scmp.eq.s32.totalorder %s24, 1
      %p89 = por %p87, %p88
      %p91 = scmp.ne.s32.totalorder %s76, %s90
      %p92 = scmp.eq.s32.totalorder %s24, 0
      %p93 = por %p91, %p92
      %s95 = sadd.s32 %s94, 1
      %p98 = scmp.eq.s32.totalorder %s18, 1
      %p99 = scmp.ne.s32.totalorder %s94, %s96
      %p100 = scmp.eq.s32.totalorder %s18, 0
      %p101 = por %p99, %p100
      %p102 = scmp.ne.s32.totalorder %s94, %s96
      %p103 = scmp.eq.s32.totalorder %s23, 1
      %p104 = por %p102, %p103
      %p105 = scmp.ne.s32.totalorder %s96, %s97
      %p106 = scmp.eq.s32.totalorder %s23, 0
      %p107 = por %p105, %p106
      %p108 = scmp.ne.s32.totalorder %s96, %s97
      %p109 = scmp.eq.s32.totalorder %s24, 1
      %p110 = por %p108, %p109
      %p112 = scmp.ne.s32.totalorder %s97, %s111
      %p113 = scmp.eq.s32.totalorder %s24, 0
      %p114 = por %p112, %p113
      %s116 = sadd.s32 %s115, 1
      %p119 = scmp.eq.s32.totalorder %s18, 1
      %p120 = scmp.ne.s32.totalorder %s115, %s117
      %p121 = scmp.eq.s32.totalorder %s18, 0
      %p122 = por %p120, %p121
      %p123 = scmp.ne.s32.totalorder %s115, %s117
      %p124 = scmp.eq.s32.totalorder %s23, 1
      %p125 = por %p123, %p124
      %p126 = scmp.ne.s32.totalorder %s117, %s118
      %p127 = scmp.eq.s32.totalorder %s23, 0
      %p128 = por %p126, %p127
      %p129 = scmp.ne.s32.totalorder %s117, %s118
      %p130 = scmp.eq.s32.totalorder %s24, 1
      %p131 = por %p129, %p130
      %p133 = scmp.ne.s32.totalorder %s118, %s132
      %p134 = scmp.eq.s32.totalorder %s24, 0
      %p135 = por %p133, %p134
      %s136 = ssub.s32 %s18, %s25
      %p137 = scmp.eq.s32.totalorder %s136, 0
      %s139 = sadd.s32 %s138, 1
      %s140 = scalar_select %p137, %s138, %s139
      %p143 = pneg %p137
      %p144 = scmp.eq.s32.totalorder %s18, 1
      %p145 = por %p143, %p144
      %p146 = scmp.ne.s32.totalorder %s138, %s141
      %p147 = scmp.eq.s32.totalorder %s18, 0
      %p148 = por %p146, %p147
      %p149 = scmp.ne.s32.totalorder %s138, %s141
      %p150 = scmp.eq.s32.totalorder %s23, 1
      %p151 = por %p149, %p150
      %p152 = scmp.ne.s32.totalorder %s141, %s142
      %p153 = scmp.eq.s32.totalorder %s23, 0
      %p154 = por %p152, %p153
      %p155 = scmp.ne.s32.totalorder %s141, %s142
      %p156 = scmp.eq.s32.totalorder %s24, 1
      %p157 = por %p155, %p156
      %p159 = scmp.ne.s32.totalorder %s142, %s158
      %p160 = scmp.eq.s32.totalorder %s24, 0
      %p161 = por %p159, %p160
      %p162 = scmp.le.s32.totalorder 1, %s18
      %p163 = scmp.lt.s32.totalorder %s18, 3
      %p164 = pnand %p162, %p163
      %p165 = pneg %p164
      // Predicated region
      $region9: #{tpu_custom_call.1} parent=5 // pred_check
        _
      $region10: #{tpu_custom_call.1} parent=5 // pred_check_branch
        %167 = sbr.rel (%p164) target = $region12
      $region11: #{tpu_custom_call.1} parent=5 // pred_region
        %s168 = ssub.s32 %s18, 1
        // Predicated region
        $region13: #{tpu_custom_call.1} parent=11 // pred_check
          %p169 = pneg %p65
        $region14: #{tpu_custom_call.1} parent=11 // pred_check_branch
          %171 = sbr.rel (%p169) target = $region16
        $region15: #{tpu_custom_call.1} parent=11 // pred_region
          %173 = vsyncadd [#allocation6], 0
          %s174 = sshll.u32 %s1, 4
          %s175 = int_to_ptr.hbm [resolvable:$true] %s174
          %s176 = sshll.u32 [#allocation5], 4
          %s177 = int_to_ptr.vmem [resolvable:$true] %s176
          %182 = dma.hbm_to_vmem [thread:$0]  %s175, 1024, %s177, [#allocation6], 64, 64, 4
        $region16: #{tpu_custom_call.1} parent=11 // pred_fallthru
          _
        // Predicated region
        $region17: #{tpu_custom_call.1} parent=11 // pred_check
          %p183 = pneg %p86
        $region18: #{tpu_custom_call.1} parent=11 // pred_check_branch
          %185 = sbr.rel (%p183) target = $region20
        $region19: #{tpu_custom_call.1} parent=11 // pred_region
          _
        $region20: #{tpu_custom_call.1} parent=11 // pred_fallthru
          _
        // Predicated region
        $region21: #{tpu_custom_call.1} parent=11 // pred_check
          %p186 = pneg %p107
        $region22: #{tpu_custom_call.1} parent=11 // pred_check_branch
          %188 = sbr.rel (%p186) target = $region24
        $region23: #{tpu_custom_call.1} parent=11 // pred_region
          %190 = vsyncadd [#allocation6], 0
          %s191 = sshll.u32 %s3, 4
          %s192 = int_to_ptr.hbm [resolvable:$true] %s191
          %s193 = sshll.u32 [#allocation7], 4
          %s194 = int_to_ptr.vmem [resolvable:$true] %s193
          %199 = dma.hbm_to_vmem [thread:$0]  %s192, 1024, %s194, [#allocation6], 64, 64, 4
        $region24: #{tpu_custom_call.1} parent=11 // pred_fallthru
          _
        // Predicated region
        $region25: #{tpu_custom_call.1} parent=11 // pred_check
          %p200 = pneg %p128
        $region26: #{tpu_custom_call.1} parent=11 // pred_check_branch
          %202 = sbr.rel (%p200) target = $region28
        $region27: #{tpu_custom_call.1} parent=11 // pred_region
          _
        $region28: #{tpu_custom_call.1} parent=11 // pred_fallthru
          _
      $region12: #{tpu_custom_call.1} parent=5 // pred_fallthru
        _
      %p203 = scmp.lt.s32.totalorder %s18, 2
      // Predicated region
      $region29: #{tpu_custom_call.1} parent=5 // pred_check
        %p204 = pneg %p203
      $region30: #{tpu_custom_call.1} parent=5 // pred_check_branch
        %206 = sbr.rel (%p204) target = $region32
      $region31: #{tpu_custom_call.1} parent=5 // pred_region
        // Predicated region
        $region33: #{tpu_custom_call.1} parent=31 // pred_check
          %p207 = pneg %p38
        $region34: #{tpu_custom_call.1} parent=31 // pred_check_branch
          %209 = sbr.rel (%p207) target = $region36
        $region35: #{tpu_custom_call.1} parent=31 // pred_region
          %s210 = sand.u32 %s28, 1
          %s211 = scalar_lea.sflag [#allocation3], %s210
          %s212 = sand.u32 %s28, 1
          %s213 = smul.addr %s212, 8
          %s214 = scalar_lea.vmem [#allocation2], %s213
          %216 = vsyncadd %s211, 0
          %s217 = smul.addr %s18, 8
          %s218 = scalar_lea.hbm %s0, %s217
          %s220 = sshll.u32 %s218, 4
          %s221 = int_to_ptr.hbm [resolvable:$true] %s220
          %s222 = sshll.u32 %s214, 4
          %s223 = int_to_ptr.vmem [resolvable:$true] %s222
          %225 = dma.hbm_to_vmem [thread:$0]  %s221, 128, %s223, %s211
        $region36: #{tpu_custom_call.1} parent=31 // pred_fallthru
          _
      $region32: #{tpu_custom_call.1} parent=5 // pred_fallthru
        _
      %p226 = scmp.le.s32.totalorder 1, %s18
      %p227 = scmp.lt.s32.totalorder %s18, 3
      %p228 = pnand %p226, %p227
      %p229 = pneg %p228
      // Predicated region
      $region37: #{tpu_custom_call.1} parent=5 // pred_check
        _
      $region38: #{tpu_custom_call.1} parent=5 // pred_check_branch
        %231 = sbr.rel (%p228) target = $region40
      $region39: #{tpu_custom_call.1} parent=5 // pred_region
        %s232 = ssub.s32 %s18, 1
        %s233 = sand.u32 %s31, 1
        %s234 = scalar_lea.sflag [#allocation3], %s233
        %s235 = sand.u32 %s31, 1
        %s236 = smul.addr %s235, 8
        %s237 = scalar_lea.vmem [#allocation2], %s236
        // Predicated region
        $region41: #{tpu_custom_call.1} parent=39 // pred_check
          %p238 = pneg %p44
        $region42: #{tpu_custom_call.1} parent=39 // pred_check_branch
          %240 = sbr.rel (%p238) target = $region44
        $region43: #{tpu_custom_call.1} parent=39 // pred_region
          %242 = dma.done %s234, 128
        $region44: #{tpu_custom_call.1} parent=39 // pred_fallthru
          _
        // Predicated region
        $region45: #{tpu_custom_call.1} parent=39 // pred_check
          %p243 = pneg %p65
        $region46: #{tpu_custom_call.1} parent=39 // pred_check_branch
          %245 = sbr.rel (%p243) target = $region48
        $region47: #{tpu_custom_call.1} parent=39 // pred_region
          %247 = dma.done [#allocation6], 1024
        $region48: #{tpu_custom_call.1} parent=39 // pred_fallthru
          _
        // Predicated region
        $region49: #{tpu_custom_call.1} parent=39 // pred_check
          %p248 = pneg %p107
        $region50: #{tpu_custom_call.1} parent=39 // pred_check_branch
          %250 = sbr.rel (%p248) target = $region52
        $region51: #{tpu_custom_call.1} parent=39 // pred_region
          %252 = dma.done [#allocation6], 1024
        $region52: #{tpu_custom_call.1} parent=39 // pred_fallthru
          _
        %s253 = sand.u32 %s31, 1
        %s254 = scalar_lea.sflag [#allocation3], %s253
        %s255 = sand.u32 %s31, 1
        %s256 = smul.addr %s255, 8
        %s257 = scalar_lea.vmem [#allocation2], %s256
        %p258 = pneg %p44
        %p259 = pneg %p41
        %p260 = pneg %p65
        %p261 = pneg %p62
        %p262 = pneg %p86
        %p263 = pneg %p83
        %p264 = pneg %p107
        %p265 = pneg %p104
        %p266 = pneg %p128
        %p267 = pneg %p125
        %p268 = pneg %p154
        %p269 = pneg %p151
        %s270 = sand.u32 %s141, 1
        %s271 = scalar_lea.sflag [#allocation4], %s270
        %s272 = sand.u32 %s141, 1
        %s273 = smul.addr %s272, 8
        %s274 = scalar_lea.vmem [#allocation8], %s273
        %v275 = vld [vmem:[%s237] sm:$0xff]
        %v276 = vpack.c.bf16 %v275, %v275
        %v277 = vld [vmem:[#allocation5] sm:$0xf]
        %v278 = vld [vmem:[#allocation5 + $0x4] sm:$0xf]
        %v279 = vld [vmem:[#allocation5 + $0x8] sm:$0xf]
        %v280 = vld [vmem:[#allocation5 + $0xc] sm:$0xf]
        %v281 = vld [vmem:[#allocation5 + $0x10] sm:$0xf]
        %v282 = vld [vmem:[#allocation5 + $0x14] sm:$0xf]
        %v283 = vld [vmem:[#allocation5 + $0x18] sm:$0xf]
        %v284 = vld [vmem:[#allocation5 + $0x1c] sm:$0xf]
        %v285 = vld [vmem:[#allocation5 + $0x20] sm:$0xf]
        %v286 = vld [vmem:[#allocation5 + $0x24] sm:$0xf]
        %v287 = vld [vmem:[#allocation5 + $0x28] sm:$0xf]
        %v288 = vld [vmem:[#allocation5 + $0x2c] sm:$0xf]
        %v289 = vld [vmem:[#allocation5 + $0x30] sm:$0xf]
        %v290 = vld [vmem:[#allocation5 + $0x34] sm:$0xf]
        %v291 = vld [vmem:[#allocation5 + $0x38] sm:$0xf]
        %v292 = vld [vmem:[#allocation5 + $0x3c] sm:$0xf]
        %v293 = vld [vmem:[%s2] sm:$0x1]
        %v295 = vperm.slane %v293, 0
        %v313 = vunpack.c.l.b16 %v277
        %v314 = vunpack.c.l.b16 %v278
        %v315 = vunpack.c.l.b16 %v279
        %v316 = vunpack.c.l.b16 %v280
        %v317 = vunpack.c.l.b16 %v281
        %v318 = vunpack.c.l.b16 %v282
        %v319 = vunpack.c.l.b16 %v283
        %v320 = vunpack.c.l.b16 %v284
        %v321 = vunpack.c.l.b16 %v285
        %v322 = vunpack.c.l.b16 %v286
        %v323 = vunpack.c.l.b16 %v287
        %v324 = vunpack.c.l.b16 %v288
        %v325 = vunpack.c.l.b16 %v289
        %v326 = vunpack.c.l.b16 %v290
        %v327 = vunpack.c.l.b16 %v291
        %v328 = vunpack.c.l.b16 %v292
        %v329 = vpack.c.b16 %v314, %v313
        %v330 = vpack.c.b16 %v316, %v315
        %v331 = vpack.c.b16 %v318, %v317
        %v332 = vpack.c.b16 %v320, %v319
        %v333 = vpack.c.b16 %v322, %v321
        %v334 = vpack.c.b16 %v324, %v323
        %v335 = vpack.c.b16 %v326, %v325
        %v336 = vpack.c.b16 %v328, %v327
        %345 = vmatpush.bf16.msra.mxu0 %v336
        %346 = vmatpush.bf16.msra.mxu0 %v335
        %347 = vmatpush.bf16.msra.mxu0 %v334
        %348 = vmatpush.bf16.msra.mxu0 %v333
        %349 = vmatpush.bf16.msra.mxu0 %v332
        %350 = vmatpush.bf16.msra.mxu0 %v331
        %351 = vmatpush.bf16.msra.mxu0 %v330
        %352 = vmatpush.bf16.msra.mxu0 %v329
        %353 = vmatmul.bf16.gmra.mxu0 %v276
        %v354 = vpop.f32.mrf.mxu0
        %v355 = vadd.f32 %v295, %v354
        %v356 = vpop.f32.mrf.mxu0
        %357 = vdwg.mxu0
        %v358 = vpack.c.bf16 %v355, %v355
        %v359 = vunpack.c.l.bf16 %v358
        %v360 = vmul.f32 %v359, %v359
        %v361 = vpack.c.bf16 %v360, %v360
        %v362 = vunpack.c.l.bf16 %v361
        %v363 = vmul.f32 %v359, %v362
        %v364 = vpack.c.bf16 %v363, %v363
        %v365 = vunpack.c.l.bf16 %v364
        %v366 = vmul.f32 %v365, 0.044677734
        %v367 = vpack.c.bf16 %v366, %v366
        %v368 = vunpack.c.l.bf16 %v367
        %v369 = vadd.f32 %v359, %v368
        %v370 = vpack.c.bf16 %v369, %v369
        %v371 = vunpack.c.l.bf16 %v370
        %v372 = vmul.f32 %v371, 0.796875
        %v373 = vpack.c.bf16 %v372, %v372
        %v374 = vunpack.c.l.bf16 %v373
        %v375 = vtanh.pop %v374
        %v376 = vpack.c.bf16 %v375, %v375
        %v377 = vunpack.c.l.bf16 %v376
        %v378 = vadd.f32 %v377, 1.0
        %v379 = vpack.c.bf16 %v378, %v378
        %v380 = vunpack.c.l.bf16 %v379
        %v381 = vmul.f32 %v380, 0.5
        %v382 = vpack.c.bf16 %v381, %v381
        %v383 = vunpack.c.l.bf16 %v382
        %v384 = vmul.f32 %v359, %v383
        %v385 = vpack.c.bf16 %v384, %v384
        %v386 = vld [vmem:[#allocation7] sm:$0xf]
        %v387 = vld [vmem:[#allocation7 + $0x4] sm:$0xf]
        %v388 = vld [vmem:[#allocation7 + $0x8] sm:$0xf]
        %v389 = vld [vmem:[#allocation7 + $0xc] sm:$0xf]
        %v390 = vld [vmem:[#allocation7 + $0x10] sm:$0xf]
        %v391 = vld [vmem:[#allocation7 + $0x14] sm:$0xf]
        %v392 = vld [vmem:[#allocation7 + $0x18] sm:$0xf]
        %v393 = vld [vmem:[#allocation7 + $0x1c] sm:$0xf]
        %v394 = vld [vmem:[#allocation7 + $0x20] sm:$0xf]
        %v395 = vld [vmem:[#allocation7 + $0x24] sm:$0xf]
        %v396 = vld [vmem:[#allocation7 + $0x28] sm:$0xf]
        %v397 = vld [vmem:[#allocation7 + $0x2c] sm:$0xf]
        %v398 = vld [vmem:[#allocation7 + $0x30] sm:$0xf]
        %v399 = vld [vmem:[#allocation7 + $0x34] sm:$0xf]
        %v400 = vld [vmem:[#allocation7 + $0x38] sm:$0xf]
        %v401 = vld [vmem:[#allocation7 + $0x3c] sm:$0xf]
        %v402 = vld [vmem:[%s4] sm:$0x1]
        %v404 = vperm.slane %v402, 0
        %v422 = vunpack.c.l.b16 %v386
        %v423 = vunpack.c.l.b16 %v387
        %v424 = vunpack.c.l.b16 %v388
        %v425 = vunpack.c.l.b16 %v389
        %v426 = vunpack.c.l.b16 %v390
        %v427 = vunpack.c.l.b16 %v391
        %v428 = vunpack.c.l.b16 %v392
        %v429 = vunpack.c.l.b16 %v393
        %v430 = vunpack.c.l.b16 %v394
        %v431 = vunpack.c.l.b16 %v395
        %v432 = vunpack.c.l.b16 %v396
        %v433 = vunpack.c.l.b16 %v397
        %v434 = vunpack.c.l.b16 %v398
        %v435 = vunpack.c.l.b16 %v399
        %v436 = vunpack.c.l.b16 %v400
        %v437 = vunpack.c.l.b16 %v401
        %v438 = vpack.c.b16 %v423, %v422
        %v439 = vpack.c.b16 %v425, %v424
        %v440 = vpack.c.b16 %v427, %v426
        %v441 = vpack.c.b16 %v429, %v428
        %v442 = vpack.c.b16 %v431, %v430
        %v443 = vpack.c.b16 %v433, %v432
        %v444 = vpack.c.b16 %v435, %v434
        %v445 = vpack.c.b16 %v437, %v436
        %454 = vmatpush.bf16.msra.mxu0 %v445
        %455 = vmatpush.bf16.msra.mxu0 %v444
        %456 = vmatpush.bf16.msra.mxu0 %v443
        %457 = vmatpush.bf16.msra.mxu0 %v442
        %458 = vmatpush.bf16.msra.mxu0 %v441
        %459 = vmatpush.bf16.msra.mxu0 %v440
        %460 = vmatpush.bf16.msra.mxu0 %v439
        %461 = vmatpush.bf16.msra.mxu0 %v438
        %462 = vmatmul.bf16.gmra.mxu0 %v385
        %v463 = vpop.f32.mrf.mxu0
        %v464 = vadd.f32 %v404, %v463
        %v465 = vpop.f32.mrf.mxu0
        %466 = vdwg.mxu0
        %v467 = vadd.f32 %v464, %v275
        %468 = vst [vmem:[%s274] sm:$0xff] %v467
        %s469 = sand.u32 %s141, 1
        %s470 = scalar_lea.sflag [#allocation4], %s469
        %s471 = sand.u32 %s141, 1
        %s472 = smul.addr %s471, 8
        %s473 = scalar_lea.vmem [#allocation8], %s472
        // Predicated region
        $region53: #{tpu_custom_call.1} parent=39 // pred_check
          %p474 = pneg %p151
        $region54: #{tpu_custom_call.1} parent=39 // pred_check_branch
          %476 = sbr.rel (%p474) target = $region56
        $region55: #{tpu_custom_call.1} parent=39 // pred_region
          %478 = vsyncadd %s470, 0
          %s479 = smul.addr %s23, 8
          %s480 = scalar_lea.hbm %s5, %s479
          %s482 = sshll.u32 %s473, 4
          %s483 = int_to_ptr.vmem [resolvable:$true] %s482
          %s484 = sshll.u32 %s480, 4
          %s485 = int_to_ptr.hbm [resolvable:$true] %s484
          %487 = dma.vmem_to_hbm [thread:$0]  %s483, 128, %s485, %s470
        $region56: #{tpu_custom_call.1} parent=39 // pred_fallthru
          _
      $region40: #{tpu_custom_call.1} parent=5 // pred_fallthru
        _
      %p488 = scmp.le.s32.totalorder 2, %s18
      // Predicated region
      $region57: #{tpu_custom_call.1} parent=5 // pred_check
        %p489 = pneg %p488
      $region58: #{tpu_custom_call.1} parent=5 // pred_check_branch
        %491 = sbr.rel (%p489) target = $region60
      $region59: #{tpu_custom_call.1} parent=5 // pred_region
        %s492 = ssub.s32 %s18, 2
        // Predicated region
        $region61: #{tpu_custom_call.1} parent=59 // pred_check
          %p493 = pneg %p157
        $region62: #{tpu_custom_call.1} parent=59 // pred_check_branch
          %495 = sbr.rel (%p493) target = $region64
        $region63: #{tpu_custom_call.1} parent=59 // pred_region
          %s496 = sand.u32 %s142, 1
          %s497 = scalar_lea.sflag [#allocation4], %s496
          %s498 = sand.u32 %s142, 1
          %s499 = smul.addr %s498, 8
          %s500 = scalar_lea.vmem [#allocation8], %s499
          %502 = dma.done %s497, 128
        $region64: #{tpu_custom_call.1} parent=59 // pred_fallthru
          _
      $region60: #{tpu_custom_call.1} parent=5 // pred_fallthru
        _
    $region6: #{tpu_custom_call.1} parent=1 // loop_footer
      %s22 = sadd.s32 1, %s18
    $region7: #{tpu_custom_call.1} parent=1 // loop_footer_branch
      %17 = sbr.rel target = $region3
    $region8: #{tpu_custom_call.1} parent=1 // loop_exit
      _
    %503 = vsyncpa [#allocation3], 1
    %s504 = scalar_lea.sflag [#allocation3], 1
    %505 = vsyncpa %s504, 1
    %506 = vsyncpa [#allocation6], 1
    %507 = vsyncpa [#allocation4], 1
    %s508 = scalar_lea.sflag [#allocation4], 1
    %509 = vsyncpa %s508, 1

</llo_original>
